<compile_context>
chip_gen: v7x
topology: tpu7x:2x2x1
jax: 0.10.0
libtpu: 0.0.40
codegen_flags: <defaults>
</compile_context>

<pallas_src>
import functools

import jax
import jax.numpy as jnp
from jax import lax
from jax.experimental import pallas as pl
from jax.experimental.pallas import tpu as pltpu


# ----------------------------------------------------------------------------
# Kernel: fused (all-segments) 3x3 conv-as-9-matmuls + bias + ReLU, per image.
# ----------------------------------------------------------------------------
def _make_y_kernel(H, W):
    HW = H * W

    def kernel(x_ref, w_ref, b_ref, o_ref):
        # x_ref: (1, Cp, HW + 2W + 2) bf16 — one image, channels x flattened
        #        spatial, with W+1 zeros of padding on each end of the row.
        # w_ref: (9, N, Cp) bf16 — all segments' 3x3 taps, tap-major (kh, kw).
        # b_ref: (N, 1)     f32  — fused biases.
        # o_ref: (1, N, HW) f32  — already channel-concatenated output.
        n_out = o_ref.shape[1]

        # Column masks for the horizontal taps (kw=0 / kw=2): zero the output
        # columns whose shifted read would cross a row boundary.  Built once.
        col = lax.broadcasted_iota(jnp.int32, (1, HW), 1)
        w_pos = col % W
        mask_l = w_pos != 0          # valid lanes for kw = 0 (dw = -1)
        mask_r = w_pos != (W - 1)    # valid lanes for kw = 2 (dw = +1)

        acc = jnp.zeros((n_out, HW), jnp.float32)
        for kh in range(3):
            for kw in range(3):
                t = kh * 3 + kw
                # tap[c, h*W + w] = x_padded[c, h + kh - 1, w + kw - 1]
                start = (W + 1) + (kh - 1) * W + (kw - 1)
                tap = x_ref[0, :, start:start + HW]          # (Cp, HW) bf16
                if kw == 0:
                    tap = jnp.where(mask_l, tap, 0)
                elif kw == 2:
                    tap = jnp.where(mask_r, tap, 0)
                acc = acc + jnp.dot(w_ref[t], tap,
                                    preferred_element_type=jnp.float32)

        acc = acc + b_ref[...]                               # (N,1) broadcast
        o_ref[0] = jnp.maximum(acc, 0.0).astype(o_ref.dtype)

    return kernel


# ----------------------------------------------------------------------------
# Y module forward: every segment (Conv2d 3x3 pad=1 + ReLU) applied to the same
# input, outputs concatenated along dim=1.  All segments fused into one call.
# ----------------------------------------------------------------------------
def y_forward(x_nchw, segment_params, dim=1):
    assert dim == 1, "fused path implements channel-dim concatenation"
    B, C, H, W = x_nchw.shape
    HW = H * W
    Cp = ((C + 7) // 8) * 8          # pad channels to a sublane multiple

    # ---- fused weights: (9, N_out, Cp) bf16, tap-major (kh, kw, ., .) ------
    w_list, b_list = [], []
    for (w, b) in segment_params:
        o = w.shape[0]
        w_list.append(jnp.transpose(w, (2, 3, 0, 1)).reshape(9, o, C))
        b_list.append(b)
    w_taps = jnp.concatenate(w_list, axis=1)                 # (9, N_out, C)
    n_out = w_taps.shape[1]
    if Cp != C:
        w_taps = jnp.pad(w_taps, ((0, 0), (0, 0), (0, Cp - C)))
    w_taps = w_taps.astype(jnp.bfloat16)
    bias = jnp.concatenate(b_list, axis=0).reshape(n_out, 1).astype(jnp.float32)

    # ---- activations: bf16 cast + ONE small pad (channels->Cp, row halo) ---
    x_flat = x_nchw.astype(jnp.bfloat16).reshape(B, C, HW)   # free reshape
    x_pad = jnp.pad(x_flat, ((0, 0), (0, Cp - C), (W + 1, W + 1)))
    hw_pad = HW + 2 * W + 2

    kernel = _make_y_kernel(H, W)
    out = pl.pallas_call(
        kernel,
        out_shape=jax.ShapeDtypeStruct((B, n_out, HW), jnp.float32),
        grid_spec=pltpu.PrefetchScalarGridSpec(
            num_scalar_prefetch=0,
            grid=(B,),
            in_specs=[
                pl.BlockSpec((1, Cp, hw_pad), lambda b: (b, 0, 0)),   # image b
                pl.BlockSpec((9, n_out, Cp), lambda b: (0, 0, 0)),    # weights
                pl.BlockSpec((n_out, 1), lambda b: (0, 0)),           # biases
            ],
            out_specs=pl.BlockSpec((1, n_out, HW), lambda b: (b, 0, 0)),
        ),
        compiler_params=pltpu.CompilerParams(
            dimension_semantics=("parallel",),
        ),
    )(x_pad, w_taps, bias)

    # Free contiguous reshape — no transpose, columns are already (h, w)-major.
    return out.reshape(B, n_out, H, W)


# ----------------------------------------------------------------------------
# Reference (pure JAX/XLA conv) for verification
# ----------------------------------------------------------------------------
def segment_forward_ref(x_nchw, w_oihw, bias):
    y = lax.conv_general_dilated(
        x_nchw, w_oihw, window_strides=(1, 1), padding="SAME",
        dimension_numbers=("NCHW", "OIHW", "NCHW"),
        precision=lax.Precision.HIGHEST)
    y = y + bias.reshape(1, -1, 1, 1)
    return jnp.maximum(y, 0.0)


if __name__ == "__main__":
    key = jax.random.PRNGKey(0)
    k_x, k_w0, k_b0, k_w1, k_b1 = jax.random.split(key, 5)

    B, C, H, W = 2, 4, 16, 16
    OUT_C = 8

    x = jax.random.normal(k_x, (B, C, H, W), dtype=jnp.float32)

    scale = 1.0 / jnp.sqrt(jnp.float32(C * 3 * 3))
    seg0 = (scale * jax.random.normal(k_w0, (OUT_C, C, 3, 3), jnp.float32),
            scale * jax.random.normal(k_b0, (OUT_C,), jnp.float32))
    seg1 = (scale * jax.random.normal(k_w1, (OUT_C, C, 3, 3), jnp.float32),
            scale * jax.random.normal(k_b1, (OUT_C,), jnp.float32))
    segment_params = [seg0, seg1]

    out = jax.jit(functools.partial(y_forward, dim=1))(x, segment_params)
    out = jax.block_until_ready(out)

    # Reference: kernel uses bf16 MXU operands with f32 accumulation, so
    # compare against an f32 conv run on identically bf16-rounded operands.
    x_bf = x.astype(jnp.bfloat16).astype(jnp.float32)
    ref = jnp.concatenate(
        [segment_forward_ref(
            x_bf, w.astype(jnp.bfloat16).astype(jnp.float32), b)
         for (w, b) in segment_params], axis=1)

    assert out.shape == (B, 2 * OUT_C, H, W), out.shape
    assert jnp.allclose(out, ref, atol=1e-4, rtol=1e-4), (
        float(jnp.max(jnp.abs(out - ref))))

    print("KERNEL_OK")
</pallas_src>

<mosaic_0001>
module attributes {stable_mosaic.version = 11 : i64} {
  func.func @kernel(%arg0: i32, %arg1: memref<1x8x290xbf16, #tpu.memory_space<vmem>>, %arg2: memref<9x16x8xbf16, #tpu.memory_space<vmem>>, %arg3: memref<16x1xf32, #tpu.memory_space<vmem>>, %arg4: memref<1x16x256xf32, #tpu.memory_space<vmem>>) attributes {dimension_semantics = [#tpu.dimension_semantics<parallel>], iteration_bounds = array<i64: 2>, scalar_prefetch = 0 : i64, scratch_operands = 0 : i64, tpu.core_type = #tpu.core_type<tc>, window_params = [{transform_indices = @transform_0, window_bounds = array<i64: 1, 8, 290>}, {pipeline_mode = #tpu.pipeline_mode<synchronous>, transform_indices = @transform_1, window_bounds = array<i64: 9, 16, 8>}, {pipeline_mode = #tpu.pipeline_mode<synchronous>, transform_indices = @transform_2, window_bounds = array<i64: 16, 1>}, {transform_indices = @transform_3, window_bounds = array<i64: 1, 16, 256>}]} {
    %0 = tpu.iota {dimensions = array<i32: 1>} : vector<1x256xi32>
    %c16_i32 = arith.constant 16 : i32
    %c0_i32 = arith.constant 0 : i32
    %1 = arith.cmpi eq, %c16_i32, %c0_i32 : i32
    %c1_i32 = arith.constant 1 : i32
    %2 = arith.select %1, %c1_i32, %c16_i32 : i32
    %3 = vector.broadcast %2 : i32 to vector<1x256xi32>
    %4 = arith.remsi %0, %3 : vector<1x256xi32>
    %c0_i32_0 = arith.constant 0 : i32
    %5 = vector.broadcast %c0_i32_0 : i32 to vector<1x256xi32>
    %6 = arith.cmpi ne, %4, %5 : vector<1x256xi32>
    %c0_i32_1 = arith.constant 0 : i32
    %7 = vector.broadcast %c0_i32_1 : i32 to vector<1x256xi32>
    %8 = arith.cmpi slt, %4, %7 : vector<1x256xi32>
    %c0_i32_2 = arith.constant 0 : i32
    %9 = arith.cmpi slt, %2, %c0_i32_2 : i32
    %10 = vector.broadcast %9 : i1 to vector<1x256xi1>
    %11 = vector.broadcast %10 : vector<1x256xi1> to vector<1x256xi1>
    %12 = arith.xori %8, %11 : vector<1x256xi1>
    %13 = arith.andi %12, %6 : vector<1x256xi1>
    %14 = vector.broadcast %2 : i32 to vector<1x256xi32>
    %15 = arith.addi %4, %14 : vector<1x256xi32>
    %16 = arith.select %13, %15, %4 : vector<1x256xi1>, vector<1x256xi32>
    %c0_i32_3 = arith.constant 0 : i32
    %17 = vector.broadcast %c0_i32_3 : i32 to vector<1x256xi32>
    %18 = arith.cmpi ne, %16, %17 : vector<1x256xi32>
    %c15_i32 = arith.constant 15 : i32
    %19 = vector.broadcast %c15_i32 : i32 to vector<1x256xi32>
    %20 = arith.cmpi ne, %16, %19 : vector<1x256xi32>
    %cst = arith.constant 0.000000e+00 : f32
    %21 = vector.broadcast %cst : f32 to vector<16x256xf32>
    %c0 = arith.constant 0 : index
    %c0_4 = arith.constant 0 : index
    %c0_5 = arith.constant 0 : index
    %22 = vector.load %arg1[%c0, %c0_4, %c0_5] : memref<1x8x290xbf16, #tpu.memory_space<vmem>>, vector<1x8x256xbf16>
    %23 = vector.shape_cast %22 : vector<1x8x256xbf16> to vector<8x256xbf16>
    %c0_i32_6 = arith.constant 0 : i32
    %24 = arith.sitofp %c0_i32_6 : i32 to bf16
    %25 = vector.shape_cast %18 : vector<1x256xi1> to vector<1x256xi1>
    %26 = vector.broadcast %25 : vector<1x256xi1> to vector<8x256xi1>
    %27 = vector.broadcast %24 : bf16 to vector<8x256xbf16>
    %28 = arith.select %26, %23, %27 : vector<8x256xi1>, vector<8x256xbf16>
    %c0_7 = arith.constant 0 : index
    %c0_8 = arith.constant 0 : index
    %c0_9 = arith.constant 0 : index
    %29 = vector.load %arg2[%c0_7, %c0_8, %c0_9] : memref<9x16x8xbf16, #tpu.memory_space<vmem>>, vector<1x16x8xbf16>
    %30 = vector.shape_cast %29 : vector<1x16x8xbf16> to vector<16x8xbf16>
    %cst_10 = arith.constant dense<0.000000e+00> : vector<16x256xf32>
    %31 = tpu.matmul %30, %28, %cst_10 {dimension_numbers = #tpu.dot_dimension_numbers<[1], [0], [0], [1], [0, 0, 1, 1], [], []>} : vector<16x8xbf16>, vector<8x256xbf16>, vector<16x256xf32> -> vector<16x256xf32>
    %32 = arith.addf %21, %31 : vector<16x256xf32>
    %c0_11 = arith.constant 0 : index
    %c0_12 = arith.constant 0 : index
    %c1 = arith.constant 1 : index
    %33 = vector.load %arg1[%c0_11, %c0_12, %c1] : memref<1x8x290xbf16, #tpu.memory_space<vmem>>, vector<1x8x256xbf16>
    %34 = vector.shape_cast %33 : vector<1x8x256xbf16> to vector<8x256xbf16>
    %c1_13 = arith.constant 1 : index
    %c0_14 = arith.constant 0 : index
    %c0_15 = arith.constant 0 : index
    %35 = vector.load %arg2[%c1_13, %c0_14, %c0_15] : memref<9x16x8xbf16, #tpu.memory_space<vmem>>, vector<1x16x8xbf16>
    %36 = vector.shape_cast %35 : vector<1x16x8xbf16> to vector<16x8xbf16>
    %cst_16 = arith.constant dense<0.000000e+00> : vector<16x256xf32>
    %37 = tpu.matmul %36, %34, %cst_16 {dimension_numbers = #tpu.dot_dimension_numbers<[1], [0], [0], [1], [0, 0, 1, 1], [], []>} : vector<16x8xbf16>, vector<8x256xbf16>, vector<16x256xf32> -> vector<16x256xf32>
    %38 = arith.addf %32, %37 : vector<16x256xf32>
    %c0_17 = arith.constant 0 : index
    %c0_18 = arith.constant 0 : index
    %c2 = arith.constant 2 : index
    %39 = vector.load %arg1[%c0_17, %c0_18, %c2] : memref<1x8x290xbf16, #tpu.memory_space<vmem>>, vector<1x8x256xbf16>
    %40 = vector.shape_cast %39 : vector<1x8x256xbf16> to vector<8x256xbf16>
    %c0_i32_19 = arith.constant 0 : i32
    %41 = arith.sitofp %c0_i32_19 : i32 to bf16
    %42 = vector.shape_cast %20 : vector<1x256xi1> to vector<1x256xi1>
    %43 = vector.broadcast %42 : vector<1x256xi1> to vector<8x256xi1>
    %44 = vector.broadcast %41 : bf16 to vector<8x256xbf16>
    %45 = arith.select %43, %40, %44 : vector<8x256xi1>, vector<8x256xbf16>
    %c2_20 = arith.constant 2 : index
    %c0_21 = arith.constant 0 : index
    %c0_22 = arith.constant 0 : index
    %46 = vector.load %arg2[%c2_20, %c0_21, %c0_22] : memref<9x16x8xbf16, #tpu.memory_space<vmem>>, vector<1x16x8xbf16>
    %47 = vector.shape_cast %46 : vector<1x16x8xbf16> to vector<16x8xbf16>
    %cst_23 = arith.constant dense<0.000000e+00> : vector<16x256xf32>
    %48 = tpu.matmul %47, %45, %cst_23 {dimension_numbers = #tpu.dot_dimension_numbers<[1], [0], [0], [1], [0, 0, 1, 1], [], []>} : vector<16x8xbf16>, vector<8x256xbf16>, vector<16x256xf32> -> vector<16x256xf32>
    %49 = arith.addf %38, %48 : vector<16x256xf32>
    %c0_24 = arith.constant 0 : index
    %c0_25 = arith.constant 0 : index
    %c16 = arith.constant 16 : index
    %50 = vector.load %arg1[%c0_24, %c0_25, %c16] : memref<1x8x290xbf16, #tpu.memory_space<vmem>>, vector<1x8x256xbf16>
    %51 = vector.shape_cast %50 : vector<1x8x256xbf16> to vector<8x256xbf16>
    %c0_i32_26 = arith.constant 0 : i32
    %52 = arith.sitofp %c0_i32_26 : i32 to bf16
    %53 = vector.shape_cast %18 : vector<1x256xi1> to vector<1x256xi1>
    %54 = vector.broadcast %53 : vector<1x256xi1> to vector<8x256xi1>
    %55 = vector.broadcast %52 : bf16 to vector<8x256xbf16>
    %56 = arith.select %54, %51, %55 : vector<8x256xi1>, vector<8x256xbf16>
    %c3 = arith.constant 3 : index
    %c0_27 = arith.constant 0 : index
    %c0_28 = arith.constant 0 : index
    %57 = vector.load %arg2[%c3, %c0_27, %c0_28] : memref<9x16x8xbf16, #tpu.memory_space<vmem>>, vector<1x16x8xbf16>
    %58 = vector.shape_cast %57 : vector<1x16x8xbf16> to vector<16x8xbf16>
    %cst_29 = arith.constant dense<0.000000e+00> : vector<16x256xf32>
    %59 = tpu.matmul %58, %56, %cst_29 {dimension_numbers = #tpu.dot_dimension_numbers<[1], [0], [0], [1], [0, 0, 1, 1], [], []>} : vector<16x8xbf16>, vector<8x256xbf16>, vector<16x256xf32> -> vector<16x256xf32>
    %60 = arith.addf %49, %59 : vector<16x256xf32>
    %c0_30 = arith.constant 0 : index
    %c0_31 = arith.constant 0 : index
    %c17 = arith.constant 17 : index
    %61 = vector.load %arg1[%c0_30, %c0_31, %c17] : memref<1x8x290xbf16, #tpu.memory_space<vmem>>, vector<1x8x256xbf16>
    %62 = vector.shape_cast %61 : vector<1x8x256xbf16> to vector<8x256xbf16>
    %c4 = arith.constant 4 : index
    %c0_32 = arith.constant 0 : index
    %c0_33 = arith.constant 0 : index
    %63 = vector.load %arg2[%c4, %c0_32, %c0_33] : memref<9x16x8xbf16, #tpu.memory_space<vmem>>, vector<1x16x8xbf16>
    %64 = vector.shape_cast %63 : vector<1x16x8xbf16> to vector<16x8xbf16>
    %cst_34 = arith.constant dense<0.000000e+00> : vector<16x256xf32>
    %65 = tpu.matmul %64, %62, %cst_34 {dimension_numbers = #tpu.dot_dimension_numbers<[1], [0], [0], [1], [0, 0, 1, 1], [], []>} : vector<16x8xbf16>, vector<8x256xbf16>, vector<16x256xf32> -> vector<16x256xf32>
    %66 = arith.addf %60, %65 : vector<16x256xf32>
    %c0_35 = arith.constant 0 : index
    %c0_36 = arith.constant 0 : index
    %c18 = arith.constant 18 : index
    %67 = vector.load %arg1[%c0_35, %c0_36, %c18] : memref<1x8x290xbf16, #tpu.memory_space<vmem>>, vector<1x8x256xbf16>
    %68 = vector.shape_cast %67 : vector<1x8x256xbf16> to vector<8x256xbf16>
    %c0_i32_37 = arith.constant 0 : i32
    %69 = arith.sitofp %c0_i32_37 : i32 to bf16
    %70 = vector.shape_cast %20 : vector<1x256xi1> to vector<1x256xi1>
    %71 = vector.broadcast %70 : vector<1x256xi1> to vector<8x256xi1>
    %72 = vector.broadcast %69 : bf16 to vector<8x256xbf16>
    %73 = arith.select %71, %68, %72 : vector<8x256xi1>, vector<8x256xbf16>
    %c5 = arith.constant 5 : index
    %c0_38 = arith.constant 0 : index
    %c0_39 = arith.constant 0 : index
    %74 = vector.load %arg2[%c5, %c0_38, %c0_39] : memref<9x16x8xbf16, #tpu.memory_space<vmem>>, vector<1x16x8xbf16>
    %75 = vector.shape_cast %74 : vector<1x16x8xbf16> to vector<16x8xbf16>
    %cst_40 = arith.constant dense<0.000000e+00> : vector<16x256xf32>
    %76 = tpu.matmul %75, %73, %cst_40 {dimension_numbers = #tpu.dot_dimension_numbers<[1], [0], [0], [1], [0, 0, 1, 1], [], []>} : vector<16x8xbf16>, vector<8x256xbf16>, vector<16x256xf32> -> vector<16x256xf32>
    %77 = arith.addf %66, %76 : vector<16x256xf32>
    %c0_41 = arith.constant 0 : index
    %c0_42 = arith.constant 0 : index
    %c32 = arith.constant 32 : index
    %78 = vector.load %arg1[%c0_41, %c0_42, %c32] : memref<1x8x290xbf16, #tpu.memory_space<vmem>>, vector<1x8x256xbf16>
    %79 = vector.shape_cast %78 : vector<1x8x256xbf16> to vector<8x256xbf16>
    %c0_i32_43 = arith.constant 0 : i32
    %80 = arith.sitofp %c0_i32_43 : i32 to bf16
    %81 = vector.shape_cast %18 : vector<1x256xi1> to vector<1x256xi1>
    %82 = vector.broadcast %81 : vector<1x256xi1> to vector<8x256xi1>
    %83 = vector.broadcast %80 : bf16 to vector<8x256xbf16>
    %84 = arith.select %82, %79, %83 : vector<8x256xi1>, vector<8x256xbf16>
    %c6 = arith.constant 6 : index
    %c0_44 = arith.constant 0 : index
    %c0_45 = arith.constant 0 : index
    %85 = vector.load %arg2[%c6, %c0_44, %c0_45] : memref<9x16x8xbf16, #tpu.memory_space<vmem>>, vector<1x16x8xbf16>
    %86 = vector.shape_cast %85 : vector<1x16x8xbf16> to vector<16x8xbf16>
    %cst_46 = arith.constant dense<0.000000e+00> : vector<16x256xf32>
    %87 = tpu.matmul %86, %84, %cst_46 {dimension_numbers = #tpu.dot_dimension_numbers<[1], [0], [0], [1], [0, 0, 1, 1], [], []>} : vector<16x8xbf16>, vector<8x256xbf16>, vector<16x256xf32> -> vector<16x256xf32>
    %88 = arith.addf %77, %87 : vector<16x256xf32>
    %c0_47 = arith.constant 0 : index
    %c0_48 = arith.constant 0 : index
    %c33 = arith.constant 33 : index
    %89 = vector.load %arg1[%c0_47, %c0_48, %c33] : memref<1x8x290xbf16, #tpu.memory_space<vmem>>, vector<1x8x256xbf16>
    %90 = vector.shape_cast %89 : vector<1x8x256xbf16> to vector<8x256xbf16>
    %c7 = arith.constant 7 : index
    %c0_49 = arith.constant 0 : index
    %c0_50 = arith.constant 0 : index
    %91 = vector.load %arg2[%c7, %c0_49, %c0_50] : memref<9x16x8xbf16, #tpu.memory_space<vmem>>, vector<1x16x8xbf16>
    %92 = vector.shape_cast %91 : vector<1x16x8xbf16> to vector<16x8xbf16>
    %cst_51 = arith.constant dense<0.000000e+00> : vector<16x256xf32>
    %93 = tpu.matmul %92, %90, %cst_51 {dimension_numbers = #tpu.dot_dimension_numbers<[1], [0], [0], [1], [0, 0, 1, 1], [], []>} : vector<16x8xbf16>, vector<8x256xbf16>, vector<16x256xf32> -> vector<16x256xf32>
    %94 = arith.addf %88, %93 : vector<16x256xf32>
    %c0_52 = arith.constant 0 : index
    %c0_53 = arith.constant 0 : index
    %c34 = arith.constant 34 : index
    %95 = vector.load %arg1[%c0_52, %c0_53, %c34] : memref<1x8x290xbf16, #tpu.memory_space<vmem>>, vector<1x8x256xbf16>
    %96 = vector.shape_cast %95 : vector<1x8x256xbf16> to vector<8x256xbf16>
    %c0_i32_54 = arith.constant 0 : i32
    %97 = arith.sitofp %c0_i32_54 : i32 to bf16
    %98 = vector.shape_cast %20 : vector<1x256xi1> to vector<1x256xi1>
    %99 = vector.broadcast %98 : vector<1x256xi1> to vector<8x256xi1>
    %100 = vector.broadcast %97 : bf16 to vector<8x256xbf16>
    %101 = arith.select %99, %96, %100 : vector<8x256xi1>, vector<8x256xbf16>
    %c8 = arith.constant 8 : index
    %c0_55 = arith.constant 0 : index
    %c0_56 = arith.constant 0 : index
    %102 = vector.load %arg2[%c8, %c0_55, %c0_56] : memref<9x16x8xbf16, #tpu.memory_space<vmem>>, vector<1x16x8xbf16>
    %103 = vector.shape_cast %102 : vector<1x16x8xbf16> to vector<16x8xbf16>
    %cst_57 = arith.constant dense<0.000000e+00> : vector<16x256xf32>
    %104 = tpu.matmul %103, %101, %cst_57 {dimension_numbers = #tpu.dot_dimension_numbers<[1], [0], [0], [1], [0, 0, 1, 1], [], []>} : vector<16x8xbf16>, vector<8x256xbf16>, vector<16x256xf32> -> vector<16x256xf32>
    %105 = arith.addf %94, %104 : vector<16x256xf32>
    %c0_58 = arith.constant 0 : index
    %c0_59 = arith.constant 0 : index
    %106 = vector.load %arg3[%c0_58, %c0_59] : memref<16x1xf32, #tpu.memory_space<vmem>>, vector<16x1xf32>
    %107 = vector.broadcast %106 : vector<16x1xf32> to vector<16x256xf32>
    %108 = arith.addf %105, %107 : vector<16x256xf32>
    %cst_60 = arith.constant 0.000000e+00 : f32
    %109 = vector.broadcast %cst_60 : f32 to vector<16x256xf32>
    %110 = arith.maximumf %108, %109 : vector<16x256xf32>
    %c0_61 = arith.constant 0 : index
    %c0_62 = arith.constant 0 : index
    %c0_63 = arith.constant 0 : index
    %111 = vector.load %arg4[%c0_61, %c0_62, %c0_63] : memref<1x16x256xf32, #tpu.memory_space<vmem>>, vector<1x16x256xf32>
    %112 = vector.shape_cast %111 : vector<1x16x256xf32> to vector<16x256xf32>
    %113 = vector.shape_cast %110 : vector<16x256xf32> to vector<1x16x256xf32>
    tpu.vector_store %arg4[%c0_61, %c0_62, %c0_63], %113 {strides = array<i32>} : memref<1x16x256xf32, #tpu.memory_space<vmem>>, vector<1x16x256xf32>,
    return
  }
  func.func @transform_0(%arg0: i32) -> (i32, i32, i32) {
    %c0_i32 = arith.constant 0 : i32
    %c0_i32_0 = arith.constant 0 : i32
    %c0_i32_1 = arith.constant 0 : i32
    return %arg0, %c0_i32, %c0_i32_0 : i32, i32, i32
  }
  func.func @transform_1(%arg0: i32) -> (i32, i32, i32) {
    %c0_i32 = arith.constant 0 : i32
    %c0_i32_0 = arith.constant 0 : i32
    %c0_i32_1 = arith.constant 0 : i32
    %c0_i32_2 = arith.constant 0 : i32
    return %c0_i32, %c0_i32_0, %c0_i32_1 : i32, i32, i32
  }
  func.func @transform_2(%arg0: i32) -> (i32, i32) {
    %c0_i32 = arith.constant 0 : i32
    %c0_i32_0 = arith.constant 0 : i32
    %c0_i32_1 = arith.constant 0 : i32
    return %c0_i32, %c0_i32_0 : i32, i32
  }
  func.func @transform_3(%arg0: i32) -> (i32, i32, i32) {
    %c0_i32 = arith.constant 0 : i32
    %c0_i32_0 = arith.constant 0 : i32
    %c0_i32_1 = arith.constant 0 : i32
    return %arg0, %c0_i32, %c0_i32_0 : i32, i32, i32
  }
}

</mosaic_0001>

<llo_original>
// kernel: y_forward.1
$region0: #{y_forward.1}
  #allocation0 [shape = 'u32[]', space=smem, size = 0x4, offset = 0x4, fixed_abs, tag = 'smem constant byte address 0x4 - core index']
  #allocation1 [shape = 'u32[144,128]{1,0:T(1,128)}', space=vmem, size = 0x12000, scoped, tag = 'internal scratch']
  %s0 = inlined_call_operand.vmem [shape: bf16[2,8,290], index: 0, kind: input, shape index: {}]
  %s1 = inlined_call_operand.vmem [shape: bf16[9,16,8], index: 1, kind: input, shape index: {}]
  %s2 = inlined_call_operand.vmem [shape: f32[16,1], index: 2, kind: input, shape index: {}]
  %s3 = inlined_call_operand.vmem [shape: f32[2,16,256], index: 3, kind: output, shape index: {}]
  %s4 = sld [smem:[#allocation0]]
  $region45: #{y_forward.1} parent=0
    _
  %s6 = ssub.s32 1, %s4
  %s7 = scalar_select 0, %s6, %s4
  loop: start=0, step=1, limit=4
  $region2: #{y_forward.1} parent=0 // loop_pre_header
    _
  $region3: #{y_forward.1} parent=0 // loop_header
    %s9 = sphi 0, %s13
    %p10 = scmp.ge.s32.totalorder %s9, 4
    %s19 = sphi 0, %s21
    %s22 = sphi 0, %s19
    %s23 = sphi 0, %s22
    %s39 = sphi 0, %s23
    %s43 = sphi 0, %s43
    %s45 = sphi 0, %s43
    %s46 = sphi 0, %s45
    %s60 = sphi 0, %s46
    %s64 = sphi 0, %s64
    %s66 = sphi 0, %s64
    %s67 = sphi 0, %s66
    %s81 = sphi 0, %s67
    %s87 = sphi 0, %s89
    %s90 = sphi 0, %s87
    %s91 = sphi 0, %s90
    %s107 = sphi 0, %s91
  $region4: #{y_forward.1} parent=0 // loop_header_branch
    %12 = sbr.rel (%p10) target = $region8
  $region5: #{y_forward.1} parent=0 // loop_body
    %s14 = ssub.s32 %s9, 1
    %s15 = ssub.s32 %s9, 2
    %s16 = sadd.s32 %s9, 1
    %s17 = ssub.s32 %s9, %s16
    %p18 = scmp.eq.s32.totalorder %s17, 0
    %s20 = sadd.s32 %s19, 1
    %s21 = scalar_select %p18, %s19, %s20
    %p24 = pneg %p18
    %p25 = scmp.eq.s32.totalorder %s9, 1
    %p26 = por %p24, %p25
    %p27 = scmp.ne.s32.totalorder %s19, %s22
    %p28 = scmp.eq.s32.totalorder %s9, 0
    %p29 = por %p27, %p28
    %p30 = scmp.ne.s32.totalorder %s19, %s22
    %p31 = scmp.eq.s32.totalorder %s14, 1
    %p32 = por %p30, %p31
    %p33 = scmp.ne.s32.totalorder %s22, %s23
    %p34 = scmp.eq.s32.totalorder %s14, 0
    %p35 = por %p33, %p34
    %p36 = scmp.ne.s32.totalorder %s22, %s23
    %p37 = scmp.eq.s32.totalorder %s15, 1
    %p38 = por %p36, %p37
    %p40 = scmp.ne.s32.totalorder %s23, %s39
    %p41 = scmp.eq.s32.totalorder %s15, 0
    %p42 = por %p40, %p41
    %s44 = sadd.s32 %s43, 1
    %p47 = scmp.eq.s32.totalorder %s9, 1
    %p48 = scmp.ne.s32.totalorder %s43, %s45
    %p49 = scmp.eq.s32.totalorder %s9, 0
    %p50 = por %p48, %p49
    %p51 = scmp.ne.s32.totalorder %s43, %s45
    %p52 = scmp.eq.s32.totalorder %s14, 1
    %p53 = por %p51, %p52
    %p54 = scmp.ne.s32.totalorder %s45, %s46
    %p55 = scmp.eq.s32.totalorder %s14, 0
    %p56 = por %p54, %p55
    %p57 = scmp.ne.s32.totalorder %s45, %s46
    %p58 = scmp.eq.s32.totalorder %s15, 1
    %p59 = por %p57, %p58
    %p61 = scmp.ne.s32.totalorder %s46, %s60
    %p62 = scmp.eq.s32.totalorder %s15, 0
    %p63 = por %p61, %p62
    %s65 = sadd.s32 %s64, 1
    %p68 = scmp.eq.s32.totalorder %s9, 1
    %p69 = scmp.ne.s32.totalorder %s64, %s66
    %p70 = scmp.eq.s32.totalorder %s9, 0
    %p71 = por %p69, %p70
    %p72 = scmp.ne.s32.totalorder %s64, %s66
    %p73 = scmp.eq.s32.totalorder %s14, 1
    %p74 = por %p72, %p73
    %p75 = scmp.ne.s32.totalorder %s66, %s67
    %p76 = scmp.eq.s32.totalorder %s14, 0
    %p77 = por %p75, %p76
    %p78 = scmp.ne.s32.totalorder %s66, %s67
    %p79 = scmp.eq.s32.totalorder %s15, 1
    %p80 = por %p78, %p79
    %p82 = scmp.ne.s32.totalorder %s67, %s81
    %p83 = scmp.eq.s32.totalorder %s15, 0
    %p84 = por %p82, %p83
    %s85 = ssub.s32 %s9, %s16
    %p86 = scmp.eq.s32.totalorder %s85, 0
    %s88 = sadd.s32 %s87, 1
    %s89 = scalar_select %p86, %s87, %s88
    %p92 = pneg %p86
    %p93 = scmp.eq.s32.totalorder %s9, 1
    %p94 = por %p92, %p93
    %p95 = scmp.ne.s32.totalorder %s87, %s90
    %p96 = scmp.eq.s32.totalorder %s9, 0
    %p97 = por %p95, %p96
    %p98 = scmp.ne.s32.totalorder %s87, %s90
    %p99 = scmp.eq.s32.totalorder %s14, 1
    %p100 = por %p98, %p99
    %p101 = scmp.ne.s32.totalorder %s90, %s91
    %p102 = scmp.eq.s32.totalorder %s14, 0
    %p103 = por %p101, %p102
    %p104 = scmp.ne.s32.totalorder %s90, %s91
    %p105 = scmp.eq.s32.totalorder %s15, 1
    %p106 = por %p104, %p105
    %p108 = scmp.ne.s32.totalorder %s91, %s107
    %p109 = scmp.eq.s32.totalorder %s15, 0
    %p110 = por %p108, %p109
    %p111 = scmp.le.s32.totalorder 1, %s9
    %p112 = scmp.lt.s32.totalorder %s9, 3
    %p113 = pnand %p111, %p112
    %p114 = pneg %p113
    // Predicated region
    $region9: #{y_forward.1} parent=5 // pred_check
      _
    $region10: #{y_forward.1} parent=5 // pred_check_branch
      %116 = sbr.rel (%p113) target = $region12
    $region11: #{y_forward.1} parent=5 // pred_region
      %s117 = ssub.s32 %s9, 1
      // Predicated region
      $region13: #{y_forward.1} parent=11 // pred_check
        %p118 = pneg %p56
      $region14: #{y_forward.1} parent=11 // pred_check_branch
        %120 = sbr.rel (%p118) target = $region16
      $region15: #{y_forward.1} parent=11 // pred_region
        _
      $region16: #{y_forward.1} parent=11 // pred_fallthru
        _
      // Predicated region
      $region17: #{y_forward.1} parent=11 // pred_check
        %p121 = pneg %p77
      $region18: #{y_forward.1} parent=11 // pred_check_branch
        %123 = sbr.rel (%p121) target = $region20
      $region19: #{y_forward.1} parent=11 // pred_region
        _
      $region20: #{y_forward.1} parent=11 // pred_fallthru
        _
    $region12: #{y_forward.1} parent=5 // pred_fallthru
      _
    %p124 = scmp.lt.s32.totalorder %s9, 2
    // Predicated region
    $region21: #{y_forward.1} parent=5 // pred_check
      %p125 = pneg %p124
    $region22: #{y_forward.1} parent=5 // pred_check_branch
      %127 = sbr.rel (%p125) target = $region24
    $region23: #{y_forward.1} parent=5 // pred_region
      // Predicated region
      $region25: #{y_forward.1} parent=23 // pred_check
        %p128 = pneg %p29
      $region26: #{y_forward.1} parent=23 // pred_check_branch
        %130 = sbr.rel (%p128) target = $region28
      $region27: #{y_forward.1} parent=23 // pred_region
        %p131 = scmp.lt.s32.totalorder %s9, 1
        %s132 = scalar_select %p131, %s9, 1
        %s133 = smul.addr %s132, 3
        %s134 = smul.addr %s133, 4
        %s135 = scalar_lea.vmem %s0, %s134
      $region28: #{y_forward.1} parent=23 // pred_fallthru
        _
    $region24: #{y_forward.1} parent=5 // pred_fallthru
      _
    %p136 = scmp.le.s32.totalorder 1, %s9
    %p137 = scmp.lt.s32.totalorder %s9, 3
    %p138 = pnand %p136, %p137
    %p139 = pneg %p138
    // Predicated region
    $region29: #{y_forward.1} parent=5 // pred_check
      _
    $region30: #{y_forward.1} parent=5 // pred_check_branch
      %141 = sbr.rel (%p138) target = $region32
    $region31: #{y_forward.1} parent=5 // pred_region
      %s142 = ssub.s32 %s9, 1
      %p143 = scmp.lt.s32.totalorder %s14, 1
      %s144 = scalar_select %p143, %s14, 1
      %s145 = smul.addr %s144, 3
      %s146 = smul.addr %s145, 4
      %s147 = scalar_lea.vmem %s0, %s146
      %p148 = pneg %p35
      %p149 = pneg %p32
      %p150 = pneg %p56
      %p151 = pneg %p53
      %p152 = pneg %p77
      %p153 = pneg %p74
      %p154 = pneg %p103
      %p155 = pneg %p100
      %p156 = scmp.lt.s32.totalorder %s14, 1
      %s157 = scalar_select %p156, %s14, 1
      %s158 = smul.addr %s157, 4
      %s159 = smul.addr %s158, 8
      %s160 = scalar_lea.vmem %s3, %s159
      %p161 = scmp.lt.s32.totalorder %s14, 1
      %s162 = scalar_select %p161, %s14, 1
      %s163 = smul.addr %s162, 3
      %s164 = smul.addr %s163, 4
      %s165 = scalar_lea.vmem %s0, %s164
      %p166 = scmp.lt.s32.totalorder %s14, 1
      %s167 = scalar_select %p166, %s14, 1
      %s168 = smul.addr %s167, 4
      %s169 = smul.addr %s168, 8
      %s170 = scalar_lea.vmem %s3, %s169
      %v174 = vlaneseq
      %v175 = vand.u32 %v174, 127
      %v176 = vadd.s32 %v175, 128
      %vm177 = vcmp.lt.s32.totalorder %v175, 0
      %v178 = vsub.s32 0, %v175
      %v179 = vsel %vm177, %v178, %v175
      %v180 = vshrl.u32 %v179, 4
      %v181 = vand.u32 %v179, 15
      %v182 = vsub.s32 0, %v181
      %v183 = vsel %vm177, %v182, %v181
      %vm184 = vcmp.lt.s32.totalorder %v176, 0
      %v185 = vsub.s32 0, %v176
      %v186 = vsel %vm184, %v185, %v176
      %v187 = vshrl.u32 %v186, 4
      %v188 = vand.u32 %v186, 15
      %v189 = vsub.s32 0, %v188
      %v190 = vsel %vm184, %v189, %v188
      %vm191 = vcmp.ne.s32.totalorder %v183, 0
      %vm192 = vcmp.ne.s32.totalorder %v190, 0
      %vm193 = vcmp.lt.s32.totalorder %v183, 0
      %vm194 = vcmp.lt.s32.totalorder %v190, 0
      %vm195 = vmand %vm193, %vm191
      %vm196 = vmand %vm194, %vm192
      %v197 = vadd.s32 %v183, 16
      %v198 = vadd.s32 %v190, 16
      %v199 = vsel %vm195, %v197, %v183
      %v200 = vsel %vm196, %v198, %v190
      %vm201 = vcmp.ne.s32.totalorder %v199, 0
      %vm202 = vcmp.ne.s32.totalorder %v200, 0
      %vm203 = vcmp.ne.s32.totalorder %v199, 15
      %vm204 = vcmp.ne.s32.totalorder %v200, 15
      %v205 = vld [vmem:[%s165] sm:$0xff]
      %v206 = vsel %vm201, 1, 0
      %v207 = vsel %vm202, 1, 0
      %vm208 = vcmp.eq.s32.totalorder %v206, 1
      %vm209 = vcmp.eq.s32.totalorder %v207, 1
      %vm210 = vmpackc.low %vm209, %vm208
      %v211 = vsel %vm210, %v205, 0
      %v212 = vld [vmem:[%s1] sm:$0xf]
      %v213 = vld [vmem:[%s1 + $0x4] sm:$0xf]
      %v214 = vld [vmem:[%s165 + $0x8] sm:$0xf]
      %s215 = scalar_lea.vmem %s1, 8
      %v216 = vld [vmem:[%s215] sm:$0xf]
      %v217 = vld [vmem:[%s215 + $0x4] sm:$0xf]
      %v220 = vunpack.c.l.b16 %v216
      %v221 = vunpack.c.l.b16 %v217
      %v222 = vpack.c.b16 %v221, %v220
      %v225 = vunpack.c.l.b16 %v205
      %v226 = vunpack.c.h.b16 %v205
      %v227 = vunpack.c.l.b16 %v214
      %v228 = vpack.c.b16 %v225, %v225
      %v229 = vpack.c.b16 %v226, %v226
      %v230 = vpack.c.b16 %v227, %v227
      %231 = vrot.lane.b32.xlu0 %v228, 127
      %v232 = vpop.permute.xlu0 %231
      %233 = vrot.lane.b32.xlu0 %v229, 127
      %v234 = vpop.permute.xlu0 %233
      %235 = vrot.lane.b32.xlu0 %v230, 127
      %v236 = vpop.permute.xlu0 %235
      %vm237 = vcmask 1039360
      %v238 = vsel %vm237, %v232, %v234
      %v239 = vsel %vm237, %v234, %v236
      %vm240 = vcmask 64512
      %v242 = vsel %vm240, %v222, 0
      %vm244 = vcmask 1043456
      %v246 = vsel %vm244, %v238, 0
      %v249 = vsel %vm244, %v239, 0
      %251 = vmatprep.subr.bf16.mxu0 %v249
      %252 = vmatpush1.bf16.msra.mxu0 %v246
      %253 = vmatprep.subr.bf16.mxu0 0
      %254 = vmatpush1.bf16.msra.mxu0 0
      %255 = vmatprep.subr.bf16.mxu0 0
      %256 = vmatpush1.bf16.msra.mxu0 0
      %257 = vmatprep.subr.bf16.mxu0 0
      %258 = vmatpush1.bf16.msra.mxu0 0
      %259 = vmatprep.subr.bf16.mxu0 0
      %260 = vmatpush1.bf16.msra.mxu0 0
      %261 = vmatprep.subr.bf16.mxu0 0
      %262 = vmatpush1.bf16.msra.mxu0 0
      %263 = vmatprep.subr.bf16.mxu0 0
      %264 = vmatpush1.bf16.msra.mxu0 0
      %265 = vmatprep.subr.bf16.mxu0 0
      %266 = vmatpush1.bf16.msra.mxu0 0
      %267 = vmatprep.subr.bf16.mxu0 0
      %268 = vmatpush1.bf16.msra.mxu0 0
      %269 = vmatprep.subr.bf16.mxu0 0
      %270 = vmatpush1.bf16.msra.mxu0 0
      %271 = vmatprep.subr.bf16.mxu0 0
      %272 = vmatpush1.bf16.msra.mxu0 0
      %273 = vmatprep.subr.bf16.mxu0 0
      %274 = vmatpush1.bf16.msra.mxu0 0
      %275 = vmatprep.subr.bf16.mxu0 0
      %276 = vmatpush1.bf16.msra.mxu0 0
      %277 = vmatprep.subr.bf16.mxu0 0
      %278 = vmatpush1.bf16.msra.mxu0 0
      %279 = vmatprep.subr.bf16.mxu0 0
      %280 = vmatpush1.bf16.msra.mxu0 0
      %281 = vmatprep.subr.bf16.mxu0 0
      %282 = vmatpush1.bf16.msra.mxu0 0
      %283 = vmatprep.mubr.bf16.mxu0 0
      %284 = vmatmul.mubr.bf16.gmra.mrb[0].mxu0 %v242
      %v285 = vpop.f32.mrb[0].mxu0
      %v286 = vadd.f32 0.0, %v285
      %v287 = vpop.f32.mrb[0].mxu0
      %v288 = vadd.f32 0.0, %v287
      %v289 = vpop.f32.mrb[0].mxu0
      %v290 = vadd.f32 0.0, %v289
      %v291 = vpop.f32.mrb[0].mxu0
      %v292 = vadd.f32 0.0, %v291
      %293 = vdwg.mxu0
      %v296 = vunpack.c.l.b16 %v212
      %v297 = vunpack.c.l.b16 %v213
      %v298 = vpack.c.b16 %v297, %v296
      %v300 = vunpack.c.l.b16 %v211
      %v301 = vunpack.c.h.b16 %v211
      %v302 = vpack.c.b16 %v300, %v300
      %v303 = vpack.c.b16 %v301, %v301
      %v305 = vsel %vm240, %v298, 0
      %v308 = vsel %vm244, %v302, 0
      %v311 = vsel %vm244, %v303, 0
      %313 = vmatprep.subr.bf16.mxu0 %v311
      %314 = vmatpush1.bf16.msra.mxu0 %v308
      %315 = vmatprep.subr.bf16.mxu0 0
      %316 = vmatpush1.bf16.msra.mxu0 0
      %317 = vmatprep.subr.bf16.mxu0 0
      %318 = vmatpush1.bf16.msra.mxu0 0
      %319 = vmatprep.subr.bf16.mxu0 0
      %320 = vmatpush1.bf16.msra.mxu0 0
      %321 = vmatprep.subr.bf16.mxu0 0
      %322 = vmatpush1.bf16.msra.mxu0 0
      %323 = vmatprep.subr.bf16.mxu0 0
      %324 = vmatpush1.bf16.msra.mxu0 0
      %325 = vmatprep.subr.bf16.mxu0 0
      %326 = vmatpush1.bf16.msra.mxu0 0
      %327 = vmatprep.subr.bf16.mxu0 0
      %328 = vmatpush1.bf16.msra.mxu0 0
      %329 = vmatprep.subr.bf16.mxu0 0
      %330 = vmatpush1.bf16.msra.mxu0 0
      %331 = vmatprep.subr.bf16.mxu0 0
      %332 = vmatpush1.bf16.msra.mxu0 0
      %333 = vmatprep.subr.bf16.mxu0 0
      %334 = vmatpush1.bf16.msra.mxu0 0
      %335 = vmatprep.subr.bf16.mxu0 0
      %336 = vmatpush1.bf16.msra.mxu0 0
      %337 = vmatprep.subr.bf16.mxu0 0
      %338 = vmatpush1.bf16.msra.mxu0 0
      %339 = vmatprep.subr.bf16.mxu0 0
      %340 = vmatpush1.bf16.msra.mxu0 0
      %341 = vmatprep.subr.bf16.mxu0 0
      %342 = vmatpush1.bf16.msra.mxu0 0
      %343 = vmatprep.subr.bf16.mxu0 0
      %344 = vmatpush1.bf16.msra.mxu0 0
      %345 = vmatprep.mubr.bf16.mxu0 0
      %346 = vmatmul.mubr.bf16.gmra.mrb[0].mxu0 %v305
      %v347 = vpop.f32.mrb[0].mxu0
      %v348 = vadd.f32 %v286, %v347
      %v349 = vpop.f32.mrb[0].mxu0
      %v350 = vadd.f32 %v288, %v349
      %v351 = vpop.f32.mrb[0].mxu0
      %v352 = vadd.f32 %v290, %v351
      %v353 = vpop.f32.mrb[0].mxu0
      %v354 = vadd.f32 %v292, %v353
      %355 = vdwg.mxu0
      %v356 = vsel %vm203, 1, 0
      %v357 = vsel %vm204, 1, 0
      %vm358 = vcmp.eq.s32.totalorder %v356, 1
      %vm359 = vcmp.eq.s32.totalorder %v357, 1
      %vm360 = vmpackc.low %vm359, %vm358
      %v361 = vsel %vm360, 65537, 0
      %362 = vrot.lane.b32.xlu0 %v361, 2
      %v363 = vpop.permute.xlu0 %362
      %v364 = vrot.slane %v363, 4
      %vm365 = vcmask 15360
      %v366 = vsel %vm365, %v364, %v363
      %vm367 = vcmp.ne.s16.totalorder %v366, 0
      %vm368 = vcmp.ne.s16.totalorder %v364, 0
      %v369 = vsel %vm367, %v205, 0
      %v370 = vsel %vm368, %v214, 0
      %s371 = scalar_lea.vmem %s1, 16
      %v372 = vld [vmem:[%s371] sm:$0xf]
      %v373 = vld [vmem:[%s371 + $0x4] sm:$0xf]
      %v376 = vunpack.c.l.b16 %v372
      %v377 = vunpack.c.l.b16 %v373
      %v378 = vpack.c.b16 %v377, %v376
      %v381 = vunpack.c.l.b16 %v369
      %v382 = vunpack.c.h.b16 %v369
      %v383 = vunpack.c.l.b16 %v370
      %v384 = vpack.c.b16 %v381, %v381
      %v385 = vpack.c.b16 %v382, %v382
      %v386 = vpack.c.b16 %v383, %v383
      %387 = vrot.lane.b32.xlu0 %v384, 126
      %v388 = vpop.permute.xlu0 %387
      %389 = vrot.lane.b32.xlu0 %v385, 126
      %v390 = vpop.permute.xlu0 %389
      %391 = vrot.lane.b32.xlu0 %v386, 126
      %v392 = vpop.permute.xlu0 %391
      %vm393 = vcmask 1031168
      %v394 = vsel %vm393, %v388, %v390
      %v395 = vsel %vm393, %v390, %v392
      %v397 = vsel %vm240, %v378, 0
      %v400 = vsel %vm244, %v394, 0
      %v403 = vsel %vm244, %v395, 0
      %405 = vmatprep.subr.bf16.mxu0 %v403
      %406 = vmatpush1.bf16.msra.mxu0 %v400
      %407 = vmatprep.subr.bf16.mxu0 0
      %408 = vmatpush1.bf16.msra.mxu0 0
      %409 = vmatprep.subr.bf16.mxu0 0
      %410 = vmatpush1.bf16.msra.mxu0 0
      %411 = vmatprep.subr.bf16.mxu0 0
      %412 = vmatpush1.bf16.msra.mxu0 0
      %413 = vmatprep.subr.bf16.mxu0 0
      %414 = vmatpush1.bf16.msra.mxu0 0
      %415 = vmatprep.subr.bf16.mxu0 0
      %416 = vmatpush1.bf16.msra.mxu0 0
      %417 = vmatprep.subr.bf16.mxu0 0
      %418 = vmatpush1.bf16.msra.mxu0 0
      %419 = vmatprep.subr.bf16.mxu0 0
      %420 = vmatpush1.bf16.msra.mxu0 0
      %421 = vmatprep.subr.bf16.mxu0 0
      %422 = vmatpush1.bf16.msra.mxu0 0
      %423 = vmatprep.subr.bf16.mxu0 0
      %424 = vmatpush1.bf16.msra.mxu0 0
      %425 = vmatprep.subr.bf16.mxu0 0
      %426 = vmatpush1.bf16.msra.mxu0 0
      %427 = vmatprep.subr.bf16.mxu0 0
      %428 = vmatpush1.bf16.msra.mxu0 0
      %429 = vmatprep.subr.bf16.mxu0 0
      %430 = vmatpush1.bf16.msra.mxu0 0
      %431 = vmatprep.subr.bf16.mxu0 0
      %432 = vmatpush1.bf16.msra.mxu0 0
      %433 = vmatprep.subr.bf16.mxu0 0
      %434 = vmatpush1.bf16.msra.mxu0 0
      %435 = vmatprep.subr.bf16.mxu0 0
      %436 = vmatpush1.bf16.msra.mxu0 0
      %437 = vmatprep.mubr.bf16.mxu0 0
      %438 = vmatmul.mubr.bf16.gmra.mrb[0].mxu0 %v397
      %v439 = vpop.f32.mrb[0].mxu0
      %v440 = vadd.f32 0.0, %v439
      %v441 = vpop.f32.mrb[0].mxu0
      %v442 = vadd.f32 0.0, %v441
      %v443 = vpop.f32.mrb[0].mxu0
      %v444 = vadd.f32 0.0, %v443
      %v445 = vpop.f32.mrb[0].mxu0
      %v446 = vadd.f32 0.0, %v445
      %447 = vdwg.mxu0
      %v448 = vadd.f32 %v348, %v440
      %v449 = vadd.f32 %v350, %v442
      %v450 = vadd.f32 %v352, %v444
      %v451 = vadd.f32 %v354, %v446
      %v452 = vsel %vm210, 65537, 0
      %453 = vrot.lane.b32.xlu0 %v452, 16
      %v454 = vpop.permute.xlu0 %453
      %v455 = vrot.slane %v454, 4
      %vm456 = vcmask 130048
      %v457 = vsel %vm456, %v455, %v454
      %vm458 = vcmp.ne.s16.totalorder %v457, 0
      %vm459 = vcmp.ne.s16.totalorder %v455, 0
      %v460 = vsel %vm458, %v205, 0
      %v461 = vsel %vm459, %v214, 0
      %s462 = scalar_lea.vmem %s1, 24
      %v463 = vld [vmem:[%s462] sm:$0xf]
      %v464 = vld [vmem:[%s462 + $0x4] sm:$0xf]
      %v467 = vunpack.c.l.b16 %v463
      %v468 = vunpack.c.l.b16 %v464
      %v469 = vpack.c.b16 %v468, %v467
      %v472 = vunpack.c.l.b16 %v460
      %v473 = vunpack.c.h.b16 %v460
      %v474 = vunpack.c.l.b16 %v461
      %v475 = vpack.c.b16 %v472, %v472
      %v476 = vpack.c.b16 %v473, %v473
      %v477 = vpack.c.b16 %v474, %v474
      %478 = vrot.lane.b32.xlu0 %v475, 112
      %v479 = vpop.permute.xlu0 %478
      %480 = vrot.lane.b32.xlu0 %v476, 112
      %v481 = vpop.permute.xlu0 %480
      %482 = vrot.lane.b32.xlu0 %v477, 112
      %v483 = vpop.permute.xlu0 %482
      %vm484 = vcmask 916480
      %v485 = vsel %vm484, %v479, %v481
      %v486 = vsel %vm484, %v481, %v483
      %v488 = vsel %vm240, %v469, 0
      %v491 = vsel %vm244, %v485, 0
      %v494 = vsel %vm244, %v486, 0
      %496 = vmatprep.subr.bf16.mxu0 %v494
      %497 = vmatpush1.bf16.msra.mxu0 %v491
      %498 = vmatprep.subr.bf16.mxu0 0
      %499 = vmatpush1.bf16.msra.mxu0 0
      %500 = vmatprep.subr.bf16.mxu0 0
      %501 = vmatpush1.bf16.msra.mxu0 0
      %502 = vmatprep.subr.bf16.mxu0 0
      %503 = vmatpush1.bf16.msra.mxu0 0
      %504 = vmatprep.subr.bf16.mxu0 0
      %505 = vmatpush1.bf16.msra.mxu0 0
      %506 = vmatprep.subr.bf16.mxu0 0
      %507 = vmatpush1.bf16.msra.mxu0 0
      %508 = vmatprep.subr.bf16.mxu0 0
      %509 = vmatpush1.bf16.msra.mxu0 0
      %510 = vmatprep.subr.bf16.mxu0 0
      %511 = vmatpush1.bf16.msra.mxu0 0
      %512 = vmatprep.subr.bf16.mxu0 0
      %513 = vmatpush1.bf16.msra.mxu0 0
      %514 = vmatprep.subr.bf16.mxu0 0
      %515 = vmatpush1.bf16.msra.mxu0 0
      %516 = vmatprep.subr.bf16.mxu0 0
      %517 = vmatpush1.bf16.msra.mxu0 0
      %518 = vmatprep.subr.bf16.mxu0 0
      %519 = vmatpush1.bf16.msra.mxu0 0
      %520 = vmatprep.subr.bf16.mxu0 0
      %521 = vmatpush1.bf16.msra.mxu0 0
      %522 = vmatprep.subr.bf16.mxu0 0
      %523 = vmatpush1.bf16.msra.mxu0 0
      %524 = vmatprep.subr.bf16.mxu0 0
      %525 = vmatpush1.bf16.msra.mxu0 0
      %526 = vmatprep.subr.bf16.mxu0 0
      %527 = vmatpush1.bf16.msra.mxu0 0
      %528 = vmatprep.mubr.bf16.mxu0 0
      %529 = vmatmul.mubr.bf16.gmra.mrb[0].mxu0 %v488
      %v530 = vpop.f32.mrb[0].mxu0
      %v531 = vadd.f32 0.0, %v530
      %v532 = vpop.f32.mrb[0].mxu0
      %v533 = vadd.f32 0.0, %v532
      %v534 = vpop.f32.mrb[0].mxu0
      %v535 = vadd.f32 0.0, %v534
      %v536 = vpop.f32.mrb[0].mxu0
      %v537 = vadd.f32 0.0, %v536
      %538 = vdwg.mxu0
      %v539 = vadd.f32 %v448, %v531
      %v540 = vadd.f32 %v449, %v533
      %v541 = vadd.f32 %v450, %v535
      %v542 = vadd.f32 %v451, %v537
      %s543 = scalar_lea.vmem %s1, 32
      %v544 = vld [vmem:[%s543] sm:$0xf]
      %v545 = vld [vmem:[%s543 + $0x4] sm:$0xf]
      %v548 = vunpack.c.l.b16 %v544
      %v549 = vunpack.c.l.b16 %v545
      %v550 = vpack.c.b16 %v549, %v548
      %551 = vrot.lane.b32.xlu0 %v228, 111
      %v552 = vpop.permute.xlu0 %551
      %553 = vrot.lane.b32.xlu0 %v229, 111
      %v554 = vpop.permute.xlu0 %553
      %555 = vrot.lane.b32.xlu0 %v230, 111
      %v556 = vpop.permute.xlu0 %555
      %vm557 = vcmask 908288
      %v558 = vsel %vm557, %v552, %v554
      %v559 = vsel %vm557, %v554, %v556
      %v561 = vsel %vm240, %v550, 0
      %v564 = vsel %vm244, %v558, 0
      %v567 = vsel %vm244, %v559, 0
      %569 = vmatprep.subr.bf16.mxu0 %v567
      %570 = vmatpush1.bf16.msra.mxu0 %v564
      %571 = vmatprep.subr.bf16.mxu0 0
      %572 = vmatpush1.bf16.msra.mxu0 0
      %573 = vmatprep.subr.bf16.mxu0 0
      %574 = vmatpush1.bf16.msra.mxu0 0
      %575 = vmatprep.subr.bf16.mxu0 0
      %576 = vmatpush1.bf16.msra.mxu0 0
      %577 = vmatprep.subr.bf16.mxu0 0
      %578 = vmatpush1.bf16.msra.mxu0 0
      %579 = vmatprep.subr.bf16.mxu0 0
      %580 = vmatpush1.bf16.msra.mxu0 0
      %581 = vmatprep.subr.bf16.mxu0 0
      %582 = vmatpush1.bf16.msra.mxu0 0
      %583 = vmatprep.subr.bf16.mxu0 0
      %584 = vmatpush1.bf16.msra.mxu0 0
      %585 = vmatprep.subr.bf16.mxu0 0
      %586 = vmatpush1.bf16.msra.mxu0 0
      %587 = vmatprep.subr.bf16.mxu0 0
      %588 = vmatpush1.bf16.msra.mxu0 0
      %589 = vmatprep.subr.bf16.mxu0 0
      %590 = vmatpush1.bf16.msra.mxu0 0
      %591 = vmatprep.subr.bf16.mxu0 0
      %592 = vmatpush1.bf16.msra.mxu0 0
      %593 = vmatprep.subr.bf16.mxu0 0
      %594 = vmatpush1.bf16.msra.mxu0 0
      %595 = vmatprep.subr.bf16.mxu0 0
      %596 = vmatpush1.bf16.msra.mxu0 0
      %597 = vmatprep.subr.bf16.mxu0 0
      %598 = vmatpush1.bf16.msra.mxu0 0
      %599 = vmatprep.subr.bf16.mxu0 0
      %600 = vmatpush1.bf16.msra.mxu0 0
      %601 = vmatprep.mubr.bf16.mxu0 0
      %602 = vmatmul.mubr.bf16.gmra.mrb[0].mxu0 %v561
      %v603 = vpop.f32.mrb[0].mxu0
      %v604 = vadd.f32 0.0, %v603
      %v605 = vpop.f32.mrb[0].mxu0
      %v606 = vadd.f32 0.0, %v605
      %v607 = vpop.f32.mrb[0].mxu0
      %v608 = vadd.f32 0.0, %v607
      %v609 = vpop.f32.mrb[0].mxu0
      %v610 = vadd.f32 0.0, %v609
      %611 = vdwg.mxu0
      %v612 = vadd.f32 %v539, %v604
      %v613 = vadd.f32 %v540, %v606
      %v614 = vadd.f32 %v541, %v608
      %v615 = vadd.f32 %v542, %v610
      %616 = vrot.lane.b32.xlu0 %v361, 18
      %v617 = vpop.permute.xlu0 %616
      %v618 = vrot.slane %v617, 4
      %vm619 = vcmask 146432
      %v620 = vsel %vm619, %v618, %v617
      %vm621 = vcmp.ne.s16.totalorder %v620, 0
      %vm622 = vcmp.ne.s16.totalorder %v618, 0
      %v623 = vsel %vm621, %v205, 0
      %v624 = vsel %vm622, %v214, 0
      %s625 = scalar_lea.vmem %s1, 40
      %v626 = vld [vmem:[%s625] sm:$0xf]
      %v627 = vld [vmem:[%s625 + $0x4] sm:$0xf]
      %v630 = vunpack.c.l.b16 %v626
      %v631 = vunpack.c.l.b16 %v627
      %v632 = vpack.c.b16 %v631, %v630
      %v635 = vunpack.c.l.b16 %v623
      %v636 = vunpack.c.h.b16 %v623
      %v637 = vunpack.c.l.b16 %v624
      %v638 = vpack.c.b16 %v635, %v635
      %v639 = vpack.c.b16 %v636, %v636
      %v640 = vpack.c.b16 %v637, %v637
      %641 = vrot.lane.b32.xlu0 %v638, 110
      %v642 = vpop.permute.xlu0 %641
      %643 = vrot.lane.b32.xlu0 %v639, 110
      %v644 = vpop.permute.xlu0 %643
      %645 = vrot.lane.b32.xlu0 %v640, 110
      %v646 = vpop.permute.xlu0 %645
      %vm647 = vcmask 900096
      %v648 = vsel %vm647, %v642, %v644
      %v649 = vsel %vm647, %v644, %v646
      %v651 = vsel %vm240, %v632, 0
      %v654 = vsel %vm244, %v648, 0
      %v657 = vsel %vm244, %v649, 0
      %659 = vmatprep.subr.bf16.mxu0 %v657
      %660 = vmatpush1.bf16.msra.mxu0 %v654
      %661 = vmatprep.subr.bf16.mxu0 0
      %662 = vmatpush1.bf16.msra.mxu0 0
      %663 = vmatprep.subr.bf16.mxu0 0
      %664 = vmatpush1.bf16.msra.mxu0 0
      %665 = vmatprep.subr.bf16.mxu0 0
      %666 = vmatpush1.bf16.msra.mxu0 0
      %667 = vmatprep.subr.bf16.mxu0 0
      %668 = vmatpush1.bf16.msra.mxu0 0
      %669 = vmatprep.subr.bf16.mxu0 0
      %670 = vmatpush1.bf16.msra.mxu0 0
      %671 = vmatprep.subr.bf16.mxu0 0
      %672 = vmatpush1.bf16.msra.mxu0 0
      %673 = vmatprep.subr.bf16.mxu0 0
      %674 = vmatpush1.bf16.msra.mxu0 0
      %675 = vmatprep.subr.bf16.mxu0 0
      %676 = vmatpush1.bf16.msra.mxu0 0
      %677 = vmatprep.subr.bf16.mxu0 0
      %678 = vmatpush1.bf16.msra.mxu0 0
      %679 = vmatprep.subr.bf16.mxu0 0
      %680 = vmatpush1.bf16.msra.mxu0 0
      %681 = vmatprep.subr.bf16.mxu0 0
      %682 = vmatpush1.bf16.msra.mxu0 0
      %683 = vmatprep.subr.bf16.mxu0 0
      %684 = vmatpush1.bf16.msra.mxu0 0
      %685 = vmatprep.subr.bf16.mxu0 0
      %686 = vmatpush1.bf16.msra.mxu0 0
      %687 = vmatprep.subr.bf16.mxu0 0
      %688 = vmatpush1.bf16.msra.mxu0 0
      %689 = vmatprep.subr.bf16.mxu0 0
      %690 = vmatpush1.bf16.msra.mxu0 0
      %691 = vmatprep.mubr.bf16.mxu0 0
      %692 = vmatmul.mubr.bf16.gmra.mrb[0].mxu0 %v651
      %v693 = vpop.f32.mrb[0].mxu0
      %v694 = vadd.f32 0.0, %v693
      %v695 = vpop.f32.mrb[0].mxu0
      %v696 = vadd.f32 0.0, %v695
      %v697 = vpop.f32.mrb[0].mxu0
      %v698 = vadd.f32 0.0, %v697
      %v699 = vpop.f32.mrb[0].mxu0
      %v700 = vadd.f32 0.0, %v699
      %701 = vdwg.mxu0
      %v702 = vadd.f32 %v612, %v694
      %v703 = vadd.f32 %v613, %v696
      %v704 = vadd.f32 %v614, %v698
      %v705 = vadd.f32 %v615, %v700
      %706 = vrot.lane.b32.xlu0 %v452, 32
      %v707 = vpop.permute.xlu0 %706
      %v708 = vrot.slane %v707, 4
      %vm709 = vcmask 261120
      %v710 = vsel %vm709, %v708, %v707
      %vm711 = vcmp.ne.s16.totalorder %v710, 0
      %vm712 = vcmp.ne.s16.totalorder %v708, 0
      %v713 = vsel %vm711, %v205, 0
      %v714 = vsel %vm712, %v214, 0
      %s715 = scalar_lea.vmem %s1, 48
      %v716 = vld [vmem:[%s715] sm:$0xf]
      %v717 = vld [vmem:[%s715 + $0x4] sm:$0xf]
      %v720 = vunpack.c.l.b16 %v716
      %v721 = vunpack.c.l.b16 %v717
      %v722 = vpack.c.b16 %v721, %v720
      %v725 = vunpack.c.l.b16 %v713
      %v726 = vunpack.c.h.b16 %v713
      %v727 = vunpack.c.l.b16 %v714
      %v728 = vpack.c.b16 %v725, %v725
      %v729 = vpack.c.b16 %v726, %v726
      %v730 = vpack.c.b16 %v727, %v727
      %731 = vrot.lane.b32.xlu0 %v728, 96
      %v732 = vpop.permute.xlu0 %731
      %733 = vrot.lane.b32.xlu0 %v729, 96
      %v734 = vpop.permute.xlu0 %733
      %735 = vrot.lane.b32.xlu0 %v730, 96
      %v736 = vpop.permute.xlu0 %735
      %vm737 = vcmask 785408
      %v738 = vsel %vm737, %v732, %v734
      %v739 = vsel %vm737, %v734, %v736
      %v741 = vsel %vm240, %v722, 0
      %v744 = vsel %vm244, %v738, 0
      %v747 = vsel %vm244, %v739, 0
      %749 = vmatprep.subr.bf16.mxu0 %v747
      %750 = vmatpush1.bf16.msra.mxu0 %v744
      %751 = vmatprep.subr.bf16.mxu0 0
      %752 = vmatpush1.bf16.msra.mxu0 0
      %753 = vmatprep.subr.bf16.mxu0 0
      %754 = vmatpush1.bf16.msra.mxu0 0
      %755 = vmatprep.subr.bf16.mxu0 0
      %756 = vmatpush1.bf16.msra.mxu0 0
      %757 = vmatprep.subr.bf16.mxu0 0
      %758 = vmatpush1.bf16.msra.mxu0 0
      %759 = vmatprep.subr.bf16.mxu0 0
      %760 = vmatpush1.bf16.msra.mxu0 0
      %761 = vmatprep.subr.bf16.mxu0 0
      %762 = vmatpush1.bf16.msra.mxu0 0
      %763 = vmatprep.subr.bf16.mxu0 0
      %764 = vmatpush1.bf16.msra.mxu0 0
      %765 = vmatprep.subr.bf16.mxu0 0
      %766 = vmatpush1.bf16.msra.mxu0 0
      %767 = vmatprep.subr.bf16.mxu0 0
      %768 = vmatpush1.bf16.msra.mxu0 0
      %769 = vmatprep.subr.bf16.mxu0 0
      %770 = vmatpush1.bf16.msra.mxu0 0
      %771 = vmatprep.subr.bf16.mxu0 0
      %772 = vmatpush1.bf16.msra.mxu0 0
      %773 = vmatprep.subr.bf16.mxu0 0
      %774 = vmatpush1.bf16.msra.mxu0 0
      %775 = vmatprep.subr.bf16.mxu0 0
      %776 = vmatpush1.bf16.msra.mxu0 0
      %777 = vmatprep.subr.bf16.mxu0 0
      %778 = vmatpush1.bf16.msra.mxu0 0
      %779 = vmatprep.subr.bf16.mxu0 0
      %780 = vmatpush1.bf16.msra.mxu0 0
      %781 = vmatprep.mubr.bf16.mxu0 0
      %782 = vmatmul.mubr.bf16.gmra.mrb[0].mxu0 %v741
      %v783 = vpop.f32.mrb[0].mxu0
      %v784 = vadd.f32 0.0, %v783
      %v785 = vpop.f32.mrb[0].mxu0
      %v786 = vadd.f32 0.0, %v785
      %v787 = vpop.f32.mrb[0].mxu0
      %v788 = vadd.f32 0.0, %v787
      %v789 = vpop.f32.mrb[0].mxu0
      %v790 = vadd.f32 0.0, %v789
      %791 = vdwg.mxu0
      %v792 = vadd.f32 %v702, %v784
      %v793 = vadd.f32 %v703, %v786
      %v794 = vadd.f32 %v704, %v788
      %v795 = vadd.f32 %v705, %v790
      %s796 = scalar_lea.vmem %s1, 56
      %v797 = vld [vmem:[%s796] sm:$0xf]
      %v798 = vld [vmem:[%s796 + $0x4] sm:$0xf]
      %v801 = vunpack.c.l.b16 %v797
      %v802 = vunpack.c.l.b16 %v798
      %v803 = vpack.c.b16 %v802, %v801
      %804 = vrot.lane.b32.xlu0 %v228, 95
      %v805 = vpop.permute.xlu0 %804
      %806 = vrot.lane.b32.xlu0 %v229, 95
      %v807 = vpop.permute.xlu0 %806
      %808 = vrot.lane.b32.xlu0 %v230, 95
      %v809 = vpop.permute.xlu0 %808
      %vm810 = vcmask 777216
      %v811 = vsel %vm810, %v805, %v807
      %v812 = vsel %vm810, %v807, %v809
      %v814 = vsel %vm240, %v803, 0
      %v817 = vsel %vm244, %v811, 0
      %v820 = vsel %vm244, %v812, 0
      %822 = vmatprep.subr.bf16.mxu0 %v820
      %823 = vmatpush1.bf16.msra.mxu0 %v817
      %824 = vmatprep.subr.bf16.mxu0 0
      %825 = vmatpush1.bf16.msra.mxu0 0
      %826 = vmatprep.subr.bf16.mxu0 0
      %827 = vmatpush1.bf16.msra.mxu0 0
      %828 = vmatprep.subr.bf16.mxu0 0
      %829 = vmatpush1.bf16.msra.mxu0 0
      %830 = vmatprep.subr.bf16.mxu0 0
      %831 = vmatpush1.bf16.msra.mxu0 0
      %832 = vmatprep.subr.bf16.mxu0 0
      %833 = vmatpush1.bf16.msra.mxu0 0
      %834 = vmatprep.subr.bf16.mxu0 0
      %835 = vmatpush1.bf16.msra.mxu0 0
      %836 = vmatprep.subr.bf16.mxu0 0
      %837 = vmatpush1.bf16.msra.mxu0 0
      %838 = vmatprep.subr.bf16.mxu0 0
      %839 = vmatpush1.bf16.msra.mxu0 0
      %840 = vmatprep.subr.bf16.mxu0 0
      %841 = vmatpush1.bf16.msra.mxu0 0
      %842 = vmatprep.subr.bf16.mxu0 0
      %843 = vmatpush1.bf16.msra.mxu0 0
      %844 = vmatprep.subr.bf16.mxu0 0
      %845 = vmatpush1.bf16.msra.mxu0 0
      %846 = vmatprep.subr.bf16.mxu0 0
      %847 = vmatpush1.bf16.msra.mxu0 0
      %848 = vmatprep.subr.bf16.mxu0 0
      %849 = vmatpush1.bf16.msra.mxu0 0
      %850 = vmatprep.subr.bf16.mxu0 0
      %851 = vmatpush1.bf16.msra.mxu0 0
      %852 = vmatprep.subr.bf16.mxu0 0
      %853 = vmatpush1.bf16.msra.mxu0 0
      %854 = vmatprep.mubr.bf16.mxu0 0
      %855 = vmatmul.mubr.bf16.gmra.mrb[0].mxu0 %v814
      %v856 = vpop.f32.mrb[0].mxu0
      %v857 = vadd.f32 0.0, %v856
      %v858 = vpop.f32.mrb[0].mxu0
      %v859 = vadd.f32 0.0, %v858
      %v860 = vpop.f32.mrb[0].mxu0
      %v861 = vadd.f32 0.0, %v860
      %v862 = vpop.f32.mrb[0].mxu0
      %v863 = vadd.f32 0.0, %v862
      %864 = vdwg.mxu0
      %v865 = vadd.f32 %v792, %v857
      %v866 = vadd.f32 %v793, %v859
      %v867 = vadd.f32 %v794, %v861
      %v868 = vadd.f32 %v795, %v863
      %869 = vrot.lane.b32.xlu0 %v361, 34
      %v870 = vpop.permute.xlu0 %869
      %v871 = vrot.slane %v870, 4
      %vm872 = vcmask 277504
      %v873 = vsel %vm872, %v871, %v870
      %vm874 = vcmp.ne.s16.totalorder %v873, 0
      %vm875 = vcmp.ne.s16.totalorder %v871, 0
      %v876 = vsel %vm874, %v205, 0
      %v877 = vsel %vm875, %v214, 0
      %s878 = scalar_lea.vmem %s1, 64
      %v879 = vld [vmem:[%s878] sm:$0xf]
      %v880 = vld [vmem:[%s878 + $0x4] sm:$0xf]
      %v883 = vunpack.c.l.b16 %v879
      %v884 = vunpack.c.l.b16 %v880
      %v885 = vpack.c.b16 %v884, %v883
      %v888 = vunpack.c.l.b16 %v876
      %v889 = vunpack.c.h.b16 %v876
      %v890 = vunpack.c.l.b16 %v877
      %v891 = vpack.c.b16 %v888, %v888
      %v892 = vpack.c.b16 %v889, %v889
      %v893 = vpack.c.b16 %v890, %v890
      %894 = vrot.lane.b32.xlu0 %v891, 94
      %v895 = vpop.permute.xlu0 %894
      %896 = vrot.lane.b32.xlu0 %v892, 94
      %v897 = vpop.permute.xlu0 %896
      %898 = vrot.lane.b32.xlu0 %v893, 94
      %v899 = vpop.permute.xlu0 %898
      %vm900 = vcmask 769024
      %v901 = vsel %vm900, %v895, %v897
      %v902 = vsel %vm900, %v897, %v899
      %v904 = vsel %vm240, %v885, 0
      %v907 = vsel %vm244, %v901, 0
      %v910 = vsel %vm244, %v902, 0
      %912 = vmatprep.subr.bf16.mxu0 %v910
      %913 = vmatpush1.bf16.msra.mxu0 %v907
      %914 = vmatprep.subr.bf16.mxu0 0
      %915 = vmatpush1.bf16.msra.mxu0 0
      %916 = vmatprep.subr.bf16.mxu0 0
      %917 = vmatpush1.bf16.msra.mxu0 0
      %918 = vmatprep.subr.bf16.mxu0 0
      %919 = vmatpush1.bf16.msra.mxu0 0
      %920 = vmatprep.subr.bf16.mxu0 0
      %921 = vmatpush1.bf16.msra.mxu0 0
      %922 = vmatprep.subr.bf16.mxu0 0
      %923 = vmatpush1.bf16.msra.mxu0 0
      %924 = vmatprep.subr.bf16.mxu0 0
      %925 = vmatpush1.bf16.msra.mxu0 0
      %926 = vmatprep.subr.bf16.mxu0 0
      %927 = vmatpush1.bf16.msra.mxu0 0
      %928 = vmatprep.subr.bf16.mxu0 0
      %929 = vmatpush1.bf16.msra.mxu0 0
      %930 = vmatprep.subr.bf16.mxu0 0
      %931 = vmatpush1.bf16.msra.mxu0 0
      %932 = vmatprep.subr.bf16.mxu0 0
      %933 = vmatpush1.bf16.msra.mxu0 0
      %934 = vmatprep.subr.bf16.mxu0 0
      %935 = vmatpush1.bf16.msra.mxu0 0
      %936 = vmatprep.subr.bf16.mxu0 0
      %937 = vmatpush1.bf16.msra.mxu0 0
      %938 = vmatprep.subr.bf16.mxu0 0
      %939 = vmatpush1.bf16.msra.mxu0 0
      %940 = vmatprep.subr.bf16.mxu0 0
      %941 = vmatpush1.bf16.msra.mxu0 0
      %942 = vmatprep.subr.bf16.mxu0 0
      %943 = vmatpush1.bf16.msra.mxu0 0
      %944 = vmatprep.mubr.bf16.mxu0 0
      %945 = vmatmul.mubr.bf16.gmra.mrb[0].mxu0 %v904
      %v946 = vpop.f32.mrb[0].mxu0
      %v947 = vadd.f32 0.0, %v946
      %v948 = vpop.f32.mrb[0].mxu0
      %v949 = vadd.f32 0.0, %v948
      %v950 = vpop.f32.mrb[0].mxu0
      %v951 = vadd.f32 0.0, %v950
      %v952 = vpop.f32.mrb[0].mxu0
      %v953 = vadd.f32 0.0, %v952
      %954 = vdwg.mxu0
      %v955 = vadd.f32 %v865, %v947
      %v956 = vadd.f32 %v866, %v949
      %v957 = vadd.f32 %v867, %v951
      %v958 = vadd.f32 %v868, %v953
      %v959 = vld [vmem:[%s2] sm:$0xff]
      %v960 = vld [vmem:[%s2 + $0x8] sm:$0xff]
      %962 = vset.pattern.permute.xlu0 0
      %963 = vperm.xlu0 %962, %v959
      %v964 = vpop.permute.xlu0 %963
      %967 = vset.pattern.permute.xlu0 0
      %968 = vperm.xlu0 %967, %v960
      %v969 = vpop.permute.xlu0 %968
      %v971 = vadd.f32 %v955, %v964
      %v972 = vadd.f32 %v956, %v964
      %v973 = vadd.f32 %v957, %v969
      %v974 = vadd.f32 %v958, %v969
      %v975 = vmax.f32 %v971, 0.0
      %v976 = vmax.f32 %v972, 0.0
      %v977 = vmax.f32 %v973, 0.0
      %v978 = vmax.f32 %v974, 0.0
      %979 = vst [vmem:[%s170] sm:$0xff] %v975
      %980 = vst [vmem:[%s170 + $0x8] sm:$0xff] %v976
      %981 = vst [vmem:[%s170 + $0x10] sm:$0xff] %v977
      %982 = vst [vmem:[%s170 + $0x18] sm:$0xff] %v978
      %p983 = scmp.lt.s32.totalorder %s14, 1
      %s984 = scalar_select %p983, %s14, 1
      %s985 = smul.addr %s984, 4
      %s986 = smul.addr %s985, 8
      %s987 = scalar_lea.vmem %s3, %s986
      // Predicated region
      $region33: #{y_forward.1} parent=31 // pred_check
        %p988 = pneg %p100
      $region34: #{y_forward.1} parent=31 // pred_check_branch
        %990 = sbr.rel (%p988) target = $region36
      $region35: #{y_forward.1} parent=31 // pred_region
        _
      $region36: #{y_forward.1} parent=31 // pred_fallthru
        _
    $region32: #{y_forward.1} parent=5 // pred_fallthru
      _
    %p991 = scmp.le.s32.totalorder 2, %s9
    // Predicated region
    $region37: #{y_forward.1} parent=5 // pred_check
      %p992 = pneg %p991
    $region38: #{y_forward.1} parent=5 // pred_check_branch
      %994 = sbr.rel (%p992) target = $region40
    $region39: #{y_forward.1} parent=5 // pred_region
      %s995 = ssub.s32 %s9, 2
      // Predicated region
      $region41: #{y_forward.1} parent=39 // pred_check
        %p996 = pneg %p106
      $region42: #{y_forward.1} parent=39 // pred_check_branch
        %998 = sbr.rel (%p996) target = $region44
      $region43: #{y_forward.1} parent=39 // pred_region
        %p999 = scmp.lt.s32.totalorder %s15, 1
        %s1000 = scalar_select %p999, %s15, 1
        %s1001 = smul.addr %s1000, 4
        %s1002 = smul.addr %s1001, 8
        %s1003 = scalar_lea.vmem %s3, %s1002
      $region44: #{y_forward.1} parent=39 // pred_fallthru
        _
    $region40: #{y_forward.1} parent=5 // pred_fallthru
      _
  $region6: #{y_forward.1} parent=0 // loop_footer
    %s13 = sadd.s32 1, %s9
  $region7: #{y_forward.1} parent=0 // loop_footer_branch
    %8 = sbr.rel target = $region3
  $region8: #{y_forward.1} parent=0 // loop_exit
    _

</llo_original>
